<compile_context>
chip_gen: v6e
topology: v6e:2x2x1
jax: 0.10.0
libtpu: 0.0.40
codegen_flags: <defaults>
</compile_context>

<pallas_src>
import jax
import jax.numpy as jnp
import numpy as np
from jax.experimental import pallas as pl
from jax.experimental.pallas import tpu as pltpu


def ode_lstm_cell_kernel(
    x_ref, h0_ref, c0_ref, dt_ref,
    wi_ref, wh_ref, b_ref,
    w1_ref, b1_ref, w2_ref, b2_ref,
    h_out_ref, c_out_ref,
):
    H = h0_ref.shape[1]

    # Input-side projection: identical for both LSTM applications -> compute once.
    # Result is lane-dense (B, 4H) = one full-width vreg row per batch element at H=32.
    xz = (jnp.dot(x_ref[...], wi_ref[...], preferred_element_type=jnp.float32)
          + b_ref[...])

    def lstm_step(h, c):
        # Single fused gate matmul on the recurrent path: (B,H) @ (H,4H).
        z = xz + jnp.dot(h, wh_ref[...], preferred_element_type=jnp.float32)
        i = jax.nn.sigmoid(z[:, 0 * H:1 * H])
        f = jax.nn.sigmoid(z[:, 1 * H:2 * H])
        g = jnp.tanh(z[:, 2 * H:3 * H])
        o = jax.nn.sigmoid(z[:, 3 * H:4 * H])
        c_new = f * c + i * g
        h_new = o * jnp.tanh(c_new)
        return h_new, c_new

    # LSTMCell applied twice with identical weights (as in the PyTorch forward).
    h1, c1 = lstm_step(h0_ref[...], c0_ref[...])
    h2, c2 = lstm_step(h1, c1)

    # Autonomous vector field: fc = Linear -> Tanh -> Linear (bias adds folded inline).
    def vf(y):
        hid = jnp.tanh(
            jnp.dot(y, w1_ref[...], preferred_element_type=jnp.float32) + b1_ref[...]
        )
        return jnp.dot(hid, w2_ref[...], preferred_element_type=jnp.float32) + b2_ref[...]

    # dt precomputed in the wrapper: (B, 1), broadcasts over H.
    dt = dt_ref[...]

    # One explicit RK4 step per batch row (trajectory index 1).
    k1 = vf(h2)
    k2 = vf(h2 + 0.5 * dt * k1)
    k3 = vf(h2 + 0.5 * dt * k2)
    k4 = vf(h2 + dt * k3)
    ht = h2 + (dt / 6.0) * (k1 + 2.0 * k2 + 2.0 * k3 + k4)

    h_out_ref[...] = ht
    c_out_ref[...] = c2


def ode_lstm_cell(x, h0, c0, ts, params):
    """Pallas wrapper. Shapes are small, so every operand is a single whole-array
    VMEM block (no grid) — the full forward runs inside one kernel invocation.
    dt is extracted from ts on the XLA side so the (B,T) ts array is never DMA'd."""
    B, H = h0.shape
    dt = (ts[:, 1:2] - ts[:, 0:1]).astype(jnp.float32)   # (B, 1)

    args = (
        x, h0, c0, dt,
        params["wi_all"], params["wh_all"], params["b_all"],
        params["w1"], params["b1"], params["w2"], params["b2"],
    )
    vmem_spec = pl.BlockSpec(memory_space=pltpu.MemorySpace.VMEM)
    h_out, c_out = pl.pallas_call(
        ode_lstm_cell_kernel,
        out_shape=(
            jax.ShapeDtypeStruct((B, H), jnp.float32),
            jax.ShapeDtypeStruct((B, H), jnp.float32),
        ),
        in_specs=[vmem_spec] * len(args),
        out_specs=(vmem_spec, vmem_spec),
    )(*args)
    return h_out, c_out


def init_params(key, input_size, hidden_size):
    """Deterministic synthetic init mirroring nn.LSTMCell / nn.Linear shapes,
    with the 4 LSTM gates packed along the output (lane) dimension."""
    ks = jax.random.split(key, 8)
    s = 1.0 / np.sqrt(hidden_size)

    def u(k, shape):
        return jax.random.uniform(k, shape, jnp.float32, -s, s)

    # PyTorch LSTMCell params: weight_ih (4H, I), weight_hh (4H, H), biases (4H,)
    # stacked in gate order i, f, g, o along dim 0. Transposing keeps that order
    # along the packed column (lane) dimension.
    w_ih = u(ks[0], (4 * hidden_size, input_size))
    w_hh = u(ks[1], (4 * hidden_size, hidden_size))
    b_sum = u(ks[2], (4 * hidden_size,)) + u(ks[3], (4 * hidden_size,))  # b_ih + b_hh

    params = {
        "wi_all": jnp.transpose(w_ih),                       # (I, 4H)
        "wh_all": jnp.transpose(w_hh),                       # (H, 4H)
        "b_all": b_sum.reshape(1, 4 * hidden_size),          # (1, 4H)
        # fc = Linear(H,H) -> Tanh -> Linear(H,H); nn.Linear weight is (out, in).
        "w1": jnp.transpose(u(ks[4], (hidden_size, hidden_size))),  # (H, H)
        "b1": u(ks[5], (hidden_size,)).reshape(1, hidden_size),
        "w2": jnp.transpose(u(ks[6], (hidden_size, hidden_size))),  # (H, H)
        "b2": u(ks[7], (hidden_size,)).reshape(1, hidden_size),
    }
    return params


if __name__ == "__main__":
    B, I, H, T = 8, 16, 32, 8   # batch, input_size, hidden_size, len(ts) per batch

    key = jax.random.PRNGKey(0)
    kx, kh, kc, kt, kp = jax.random.split(key, 5)

    x = jax.random.normal(kx, (B, I), dtype=jnp.float32)
    h0 = jax.random.normal(kh, (B, H), dtype=jnp.float32)
    c0 = jax.random.normal(kc, (B, H), dtype=jnp.float32)
    # Monotone per-batch time grids (only the first two points matter).
    ts = jnp.cumsum(jax.random.uniform(kt, (B, T), jnp.float32, 0.01, 0.2), axis=1)

    params = init_params(kp, I, H)

    h_out, c_out = ode_lstm_cell(x, h0, c0, ts, params)
    jax.block_until_ready((h_out, c_out))

    assert h_out.shape == (B, H) and c_out.shape == (B, H)
    assert bool(jnp.all(jnp.isfinite(h_out))) and bool(jnp.all(jnp.isfinite(c_out)))
    print("KERNEL_OK")
</pallas_src>

<mosaic_0001>
module attributes {stable_mosaic.version = 11 : i64} {
  func.func @ode_lstm_cell_kernel(%arg0: memref<8x16xf32, #tpu.memory_space<vmem>>, %arg1: memref<8x32xf32, #tpu.memory_space<vmem>>, %arg2: memref<8x32xf32, #tpu.memory_space<vmem>>, %arg3: memref<8x1xf32, #tpu.memory_space<vmem>>, %arg4: memref<16x128xf32, #tpu.memory_space<vmem>>, %arg5: memref<32x128xf32, #tpu.memory_space<vmem>>, %arg6: memref<1x128xf32, #tpu.memory_space<vmem>>, %arg7: memref<32x32xf32, #tpu.memory_space<vmem>>, %arg8: memref<1x32xf32, #tpu.memory_space<vmem>>, %arg9: memref<32x32xf32, #tpu.memory_space<vmem>>, %arg10: memref<1x32xf32, #tpu.memory_space<vmem>>, %arg11: memref<8x32xf32, #tpu.memory_space<vmem>>, %arg12: memref<8x32xf32, #tpu.memory_space<vmem>>) attributes {dimension_semantics = [], scalar_prefetch = 0 : i64, scratch_operands = 0 : i64, tpu.core_type = #tpu.core_type<tc>} {
    %c0 = arith.constant 0 : index
    %c0_0 = arith.constant 0 : index
    %0 = vector.load %arg0[%c0, %c0_0] : memref<8x16xf32, #tpu.memory_space<vmem>>, vector<8x16xf32>
    %c0_1 = arith.constant 0 : index
    %c0_2 = arith.constant 0 : index
    %1 = vector.load %arg4[%c0_1, %c0_2] : memref<16x128xf32, #tpu.memory_space<vmem>>, vector<16x128xf32>
    %cst = arith.constant dense<0.000000e+00> : vector<8x128xf32>
    %2 = tpu.matmul %0, %1, %cst {dimension_numbers = #tpu.dot_dimension_numbers<[1], [0], [0], [1], [0, 0, 1, 1], [], []>} : vector<8x16xf32>, vector<16x128xf32>, vector<8x128xf32> -> vector<8x128xf32>
    %c0_3 = arith.constant 0 : index
    %c0_4 = arith.constant 0 : index
    %3 = vector.load %arg6[%c0_3, %c0_4] : memref<1x128xf32, #tpu.memory_space<vmem>>, vector<1x128xf32>
    %4 = vector.broadcast %3 : vector<1x128xf32> to vector<8x128xf32>
    %5 = arith.addf %2, %4 : vector<8x128xf32>
    %c0_5 = arith.constant 0 : index
    %c0_6 = arith.constant 0 : index
    %6 = vector.load %arg1[%c0_5, %c0_6] : memref<8x32xf32, #tpu.memory_space<vmem>>, vector<8x32xf32>
    %c0_7 = arith.constant 0 : index
    %c0_8 = arith.constant 0 : index
    %7 = vector.load %arg2[%c0_7, %c0_8] : memref<8x32xf32, #tpu.memory_space<vmem>>, vector<8x32xf32>
    %c0_9 = arith.constant 0 : index
    %c0_10 = arith.constant 0 : index
    %8 = vector.load %arg5[%c0_9, %c0_10] : memref<32x128xf32, #tpu.memory_space<vmem>>, vector<32x128xf32>
    %cst_11 = arith.constant dense<0.000000e+00> : vector<8x128xf32>
    %9 = tpu.matmul %6, %8, %cst_11 {dimension_numbers = #tpu.dot_dimension_numbers<[1], [0], [0], [1], [0, 0, 1, 1], [], []>} : vector<8x32xf32>, vector<32x128xf32>, vector<8x128xf32> -> vector<8x128xf32>
    %10 = arith.addf %5, %9 : vector<8x128xf32>
    %11 = vector.extract_strided_slice %10 {offsets = [0, 0], sizes = [8, 32], strides = [1, 1]} : vector<8x128xf32> to vector<8x32xf32>
    %12 = arith.negf %11 : vector<8x32xf32>
    %13 = math.exp %12 : vector<8x32xf32>
    %cst_12 = arith.constant 1.000000e+00 : f32
    %14 = vector.broadcast %cst_12 : f32 to vector<8x32xf32>
    %15 = arith.addf %14, %13 : vector<8x32xf32>
    %16 = arith.divf %14, %15 : vector<8x32xf32>
    %17 = vector.extract_strided_slice %10 {offsets = [0, 32], sizes = [8, 32], strides = [1, 1]} : vector<8x128xf32> to vector<8x32xf32>
    %18 = arith.negf %17 : vector<8x32xf32>
    %19 = math.exp %18 : vector<8x32xf32>
    %cst_13 = arith.constant 1.000000e+00 : f32
    %20 = vector.broadcast %cst_13 : f32 to vector<8x32xf32>
    %21 = arith.addf %20, %19 : vector<8x32xf32>
    %22 = arith.divf %20, %21 : vector<8x32xf32>
    %23 = vector.extract_strided_slice %10 {offsets = [0, 64], sizes = [8, 32], strides = [1, 1]} : vector<8x128xf32> to vector<8x32xf32>
    %24 = math.tanh %23 : vector<8x32xf32>
    %25 = vector.extract_strided_slice %10 {offsets = [0, 96], sizes = [8, 32], strides = [1, 1]} : vector<8x128xf32> to vector<8x32xf32>
    %26 = arith.negf %25 : vector<8x32xf32>
    %27 = math.exp %26 : vector<8x32xf32>
    %cst_14 = arith.constant 1.000000e+00 : f32
    %28 = vector.broadcast %cst_14 : f32 to vector<8x32xf32>
    %29 = arith.addf %28, %27 : vector<8x32xf32>
    %30 = arith.divf %28, %29 : vector<8x32xf32>
    %31 = arith.mulf %22, %7 : vector<8x32xf32>
    %32 = arith.mulf %16, %24 : vector<8x32xf32>
    %33 = arith.addf %31, %32 : vector<8x32xf32>
    %34 = math.tanh %33 : vector<8x32xf32>
    %35 = arith.mulf %30, %34 : vector<8x32xf32>
    %c0_15 = arith.constant 0 : index
    %c0_16 = arith.constant 0 : index
    %36 = vector.load %arg5[%c0_15, %c0_16] : memref<32x128xf32, #tpu.memory_space<vmem>>, vector<32x128xf32>
    %cst_17 = arith.constant dense<0.000000e+00> : vector<8x128xf32>
    %37 = tpu.matmul %35, %36, %cst_17 {dimension_numbers = #tpu.dot_dimension_numbers<[1], [0], [0], [1], [0, 0, 1, 1], [], []>} : vector<8x32xf32>, vector<32x128xf32>, vector<8x128xf32> -> vector<8x128xf32>
    %38 = arith.addf %5, %37 : vector<8x128xf32>
    %39 = vector.extract_strided_slice %38 {offsets = [0, 0], sizes = [8, 32], strides = [1, 1]} : vector<8x128xf32> to vector<8x32xf32>
    %40 = arith.negf %39 : vector<8x32xf32>
    %41 = math.exp %40 : vector<8x32xf32>
    %cst_18 = arith.constant 1.000000e+00 : f32
    %42 = vector.broadcast %cst_18 : f32 to vector<8x32xf32>
    %43 = arith.addf %42, %41 : vector<8x32xf32>
    %44 = arith.divf %42, %43 : vector<8x32xf32>
    %45 = vector.extract_strided_slice %38 {offsets = [0, 32], sizes = [8, 32], strides = [1, 1]} : vector<8x128xf32> to vector<8x32xf32>
    %46 = arith.negf %45 : vector<8x32xf32>
    %47 = math.exp %46 : vector<8x32xf32>
    %cst_19 = arith.constant 1.000000e+00 : f32
    %48 = vector.broadcast %cst_19 : f32 to vector<8x32xf32>
    %49 = arith.addf %48, %47 : vector<8x32xf32>
    %50 = arith.divf %48, %49 : vector<8x32xf32>
    %51 = vector.extract_strided_slice %38 {offsets = [0, 64], sizes = [8, 32], strides = [1, 1]} : vector<8x128xf32> to vector<8x32xf32>
    %52 = math.tanh %51 : vector<8x32xf32>
    %53 = vector.extract_strided_slice %38 {offsets = [0, 96], sizes = [8, 32], strides = [1, 1]} : vector<8x128xf32> to vector<8x32xf32>
    %54 = arith.negf %53 : vector<8x32xf32>
    %55 = math.exp %54 : vector<8x32xf32>
    %cst_20 = arith.constant 1.000000e+00 : f32
    %56 = vector.broadcast %cst_20 : f32 to vector<8x32xf32>
    %57 = arith.addf %56, %55 : vector<8x32xf32>
    %58 = arith.divf %56, %57 : vector<8x32xf32>
    %59 = arith.mulf %50, %33 : vector<8x32xf32>
    %60 = arith.mulf %44, %52 : vector<8x32xf32>
    %61 = arith.addf %59, %60 : vector<8x32xf32>
    %62 = math.tanh %61 : vector<8x32xf32>
    %63 = arith.mulf %58, %62 : vector<8x32xf32>
    %c0_21 = arith.constant 0 : index
    %c0_22 = arith.constant 0 : index
    %64 = vector.load %arg3[%c0_21, %c0_22] : memref<8x1xf32, #tpu.memory_space<vmem>>, vector<8x1xf32>
    %c0_23 = arith.constant 0 : index
    %c0_24 = arith.constant 0 : index
    %65 = vector.load %arg7[%c0_23, %c0_24] : memref<32x32xf32, #tpu.memory_space<vmem>>, vector<32x32xf32>
    %cst_25 = arith.constant dense<0.000000e+00> : vector<8x32xf32>
    %66 = tpu.matmul %63, %65, %cst_25 {dimension_numbers = #tpu.dot_dimension_numbers<[1], [0], [0], [1], [0, 0, 1, 1], [], []>} : vector<8x32xf32>, vector<32x32xf32>, vector<8x32xf32> -> vector<8x32xf32>
    %c0_26 = arith.constant 0 : index
    %c0_27 = arith.constant 0 : index
    %67 = vector.load %arg8[%c0_26, %c0_27] : memref<1x32xf32, #tpu.memory_space<vmem>>, vector<1x32xf32>
    %68 = vector.broadcast %67 : vector<1x32xf32> to vector<8x32xf32>
    %69 = arith.addf %66, %68 : vector<8x32xf32>
    %70 = math.tanh %69 : vector<8x32xf32>
    %c0_28 = arith.constant 0 : index
    %c0_29 = arith.constant 0 : index
    %71 = vector.load %arg9[%c0_28, %c0_29] : memref<32x32xf32, #tpu.memory_space<vmem>>, vector<32x32xf32>
    %cst_30 = arith.constant dense<0.000000e+00> : vector<8x32xf32>
    %72 = tpu.matmul %70, %71, %cst_30 {dimension_numbers = #tpu.dot_dimension_numbers<[1], [0], [0], [1], [0, 0, 1, 1], [], []>} : vector<8x32xf32>, vector<32x32xf32>, vector<8x32xf32> -> vector<8x32xf32>
    %c0_31 = arith.constant 0 : index
    %c0_32 = arith.constant 0 : index
    %73 = vector.load %arg10[%c0_31, %c0_32] : memref<1x32xf32, #tpu.memory_space<vmem>>, vector<1x32xf32>
    %74 = vector.broadcast %73 : vector<1x32xf32> to vector<8x32xf32>
    %75 = arith.addf %72, %74 : vector<8x32xf32>
    %cst_33 = arith.constant 5.000000e-01 : f32
    %76 = vector.broadcast %cst_33 : f32 to vector<8x1xf32>
    %77 = arith.mulf %76, %64 : vector<8x1xf32>
    %78 = vector.broadcast %77 : vector<8x1xf32> to vector<8x32xf32>
    %79 = arith.mulf %78, %75 : vector<8x32xf32>
    %80 = arith.addf %63, %79 : vector<8x32xf32>
    %c0_34 = arith.constant 0 : index
    %c0_35 = arith.constant 0 : index
    %81 = vector.load %arg7[%c0_34, %c0_35] : memref<32x32xf32, #tpu.memory_space<vmem>>, vector<32x32xf32>
    %cst_36 = arith.constant dense<0.000000e+00> : vector<8x32xf32>
    %82 = tpu.matmul %80, %81, %cst_36 {dimension_numbers = #tpu.dot_dimension_numbers<[1], [0], [0], [1], [0, 0, 1, 1], [], []>} : vector<8x32xf32>, vector<32x32xf32>, vector<8x32xf32> -> vector<8x32xf32>
    %c0_37 = arith.constant 0 : index
    %c0_38 = arith.constant 0 : index
    %83 = vector.load %arg8[%c0_37, %c0_38] : memref<1x32xf32, #tpu.memory_space<vmem>>, vector<1x32xf32>
    %84 = vector.broadcast %83 : vector<1x32xf32> to vector<8x32xf32>
    %85 = arith.addf %82, %84 : vector<8x32xf32>
    %86 = math.tanh %85 : vector<8x32xf32>
    %c0_39 = arith.constant 0 : index
    %c0_40 = arith.constant 0 : index
    %87 = vector.load %arg9[%c0_39, %c0_40] : memref<32x32xf32, #tpu.memory_space<vmem>>, vector<32x32xf32>
    %cst_41 = arith.constant dense<0.000000e+00> : vector<8x32xf32>
    %88 = tpu.matmul %86, %87, %cst_41 {dimension_numbers = #tpu.dot_dimension_numbers<[1], [0], [0], [1], [0, 0, 1, 1], [], []>} : vector<8x32xf32>, vector<32x32xf32>, vector<8x32xf32> -> vector<8x32xf32>
    %c0_42 = arith.constant 0 : index
    %c0_43 = arith.constant 0 : index
    %89 = vector.load %arg10[%c0_42, %c0_43] : memref<1x32xf32, #tpu.memory_space<vmem>>, vector<1x32xf32>
    %90 = vector.broadcast %89 : vector<1x32xf32> to vector<8x32xf32>
    %91 = arith.addf %88, %90 : vector<8x32xf32>
    %cst_44 = arith.constant 5.000000e-01 : f32
    %92 = vector.broadcast %cst_44 : f32 to vector<8x1xf32>
    %93 = arith.mulf %92, %64 : vector<8x1xf32>
    %94 = vector.broadcast %93 : vector<8x1xf32> to vector<8x32xf32>
    %95 = arith.mulf %94, %91 : vector<8x32xf32>
    %96 = arith.addf %63, %95 : vector<8x32xf32>
    %c0_45 = arith.constant 0 : index
    %c0_46 = arith.constant 0 : index
    %97 = vector.load %arg7[%c0_45, %c0_46] : memref<32x32xf32, #tpu.memory_space<vmem>>, vector<32x32xf32>
    %cst_47 = arith.constant dense<0.000000e+00> : vector<8x32xf32>
    %98 = tpu.matmul %96, %97, %cst_47 {dimension_numbers = #tpu.dot_dimension_numbers<[1], [0], [0], [1], [0, 0, 1, 1], [], []>} : vector<8x32xf32>, vector<32x32xf32>, vector<8x32xf32> -> vector<8x32xf32>
    %c0_48 = arith.constant 0 : index
    %c0_49 = arith.constant 0 : index
    %99 = vector.load %arg8[%c0_48, %c0_49] : memref<1x32xf32, #tpu.memory_space<vmem>>, vector<1x32xf32>
    %100 = vector.broadcast %99 : vector<1x32xf32> to vector<8x32xf32>
    %101 = arith.addf %98, %100 : vector<8x32xf32>
    %102 = math.tanh %101 : vector<8x32xf32>
    %c0_50 = arith.constant 0 : index
    %c0_51 = arith.constant 0 : index
    %103 = vector.load %arg9[%c0_50, %c0_51] : memref<32x32xf32, #tpu.memory_space<vmem>>, vector<32x32xf32>
    %cst_52 = arith.constant dense<0.000000e+00> : vector<8x32xf32>
    %104 = tpu.matmul %102, %103, %cst_52 {dimension_numbers = #tpu.dot_dimension_numbers<[1], [0], [0], [1], [0, 0, 1, 1], [], []>} : vector<8x32xf32>, vector<32x32xf32>, vector<8x32xf32> -> vector<8x32xf32>
    %c0_53 = arith.constant 0 : index
    %c0_54 = arith.constant 0 : index
    %105 = vector.load %arg10[%c0_53, %c0_54] : memref<1x32xf32, #tpu.memory_space<vmem>>, vector<1x32xf32>
    %106 = vector.broadcast %105 : vector<1x32xf32> to vector<8x32xf32>
    %107 = arith.addf %104, %106 : vector<8x32xf32>
    %108 = vector.broadcast %64 : vector<8x1xf32> to vector<8x32xf32>
    %109 = arith.mulf %108, %107 : vector<8x32xf32>
    %110 = arith.addf %63, %109 : vector<8x32xf32>
    %c0_55 = arith.constant 0 : index
    %c0_56 = arith.constant 0 : index
    %111 = vector.load %arg7[%c0_55, %c0_56] : memref<32x32xf32, #tpu.memory_space<vmem>>, vector<32x32xf32>
    %cst_57 = arith.constant dense<0.000000e+00> : vector<8x32xf32>
    %112 = tpu.matmul %110, %111, %cst_57 {dimension_numbers = #tpu.dot_dimension_numbers<[1], [0], [0], [1], [0, 0, 1, 1], [], []>} : vector<8x32xf32>, vector<32x32xf32>, vector<8x32xf32> -> vector<8x32xf32>
    %c0_58 = arith.constant 0 : index
    %c0_59 = arith.constant 0 : index
    %113 = vector.load %arg8[%c0_58, %c0_59] : memref<1x32xf32, #tpu.memory_space<vmem>>, vector<1x32xf32>
    %114 = vector.broadcast %113 : vector<1x32xf32> to vector<8x32xf32>
    %115 = arith.addf %112, %114 : vector<8x32xf32>
    %116 = math.tanh %115 : vector<8x32xf32>
    %c0_60 = arith.constant 0 : index
    %c0_61 = arith.constant 0 : index
    %117 = vector.load %arg9[%c0_60, %c0_61] : memref<32x32xf32, #tpu.memory_space<vmem>>, vector<32x32xf32>
    %cst_62 = arith.constant dense<0.000000e+00> : vector<8x32xf32>
    %118 = tpu.matmul %116, %117, %cst_62 {dimension_numbers = #tpu.dot_dimension_numbers<[1], [0], [0], [1], [0, 0, 1, 1], [], []>} : vector<8x32xf32>, vector<32x32xf32>, vector<8x32xf32> -> vector<8x32xf32>
    %c0_63 = arith.constant 0 : index
    %c0_64 = arith.constant 0 : index
    %119 = vector.load %arg10[%c0_63, %c0_64] : memref<1x32xf32, #tpu.memory_space<vmem>>, vector<1x32xf32>
    %120 = vector.broadcast %119 : vector<1x32xf32> to vector<8x32xf32>
    %121 = arith.addf %118, %120 : vector<8x32xf32>
    %cst_65 = arith.constant 6.000000e+00 : f32
    %122 = vector.broadcast %cst_65 : f32 to vector<8x1xf32>
    %123 = arith.divf %64, %122 : vector<8x1xf32>
    %cst_66 = arith.constant 2.000000e+00 : f32
    %124 = vector.broadcast %cst_66 : f32 to vector<8x32xf32>
    %125 = arith.mulf %124, %91 : vector<8x32xf32>
    %126 = arith.addf %75, %125 : vector<8x32xf32>
    %cst_67 = arith.constant 2.000000e+00 : f32
    %127 = vector.broadcast %cst_67 : f32 to vector<8x32xf32>
    %128 = arith.mulf %127, %107 : vector<8x32xf32>
    %129 = arith.addf %126, %128 : vector<8x32xf32>
    %130 = arith.addf %129, %121 : vector<8x32xf32>
    %131 = vector.broadcast %123 : vector<8x1xf32> to vector<8x32xf32>
    %132 = arith.mulf %131, %130 : vector<8x32xf32>
    %133 = arith.addf %63, %132 : vector<8x32xf32>
    %c0_68 = arith.constant 0 : index
    %c0_69 = arith.constant 0 : index
    %134 = vector.load %arg11[%c0_68, %c0_69] : memref<8x32xf32, #tpu.memory_space<vmem>>, vector<8x32xf32>
    tpu.vector_store %arg11[%c0_68, %c0_69], %133 {strides = array<i32>} : memref<8x32xf32, #tpu.memory_space<vmem>>, vector<8x32xf32>,
    %c0_70 = arith.constant 0 : index
    %c0_71 = arith.constant 0 : index
    %135 = vector.load %arg12[%c0_70, %c0_71] : memref<8x32xf32, #tpu.memory_space<vmem>>, vector<8x32xf32>
    tpu.vector_store %arg12[%c0_70, %c0_71], %61 {strides = array<i32>} : memref<8x32xf32, #tpu.memory_space<vmem>>, vector<8x32xf32>,
    return
  }
}

</mosaic_0001>

<llo_original>
// kernel: tpu_custom_call.1
$region0: #{tpu_custom_call.1}
  #allocation0 [shape = 'u32[]', space=smem, size = 0x4, offset = 0x4, fixed_abs, tag = 'smem constant byte address 0x4 - core index']
  #allocation1 [shape = 'u32[144,128]{1,0:T(1,128)}', space=vmem, size = 0x12000, scoped, tag = 'internal scratch']
  %s0 = inlined_call_operand.hbm [shape: f32[8,16], index: 0, kind: input, shape index: {}]
  %s1 = inlined_call_operand.hbm [shape: f32[8,32], index: 1, kind: input, shape index: {}]
  %s2 = inlined_call_operand.hbm [shape: f32[8,32], index: 2, kind: input, shape index: {}]
  %s3 = inlined_call_operand.vmem [shape: f32[8,1], index: 3, kind: input, shape index: {}]
  %s4 = inlined_call_operand.vmem [shape: f32[16,128], index: 4, kind: input, shape index: {}]
  %s5 = inlined_call_operand.hbm [shape: f32[32,128], index: 5, kind: input, shape index: {}]
  %s6 = inlined_call_operand.vmem [shape: f32[1,128], index: 6, kind: input, shape index: {}]
  %s7 = inlined_call_operand.hbm [shape: f32[32,32], index: 7, kind: input, shape index: {}]
  %s8 = inlined_call_operand.vmem [shape: f32[1,32], index: 8, kind: input, shape index: {}]
  %s9 = inlined_call_operand.hbm [shape: f32[32,32], index: 9, kind: input, shape index: {}]
  %s10 = inlined_call_operand.vmem [shape: f32[1,32], index: 10, kind: input, shape index: {}]
  %s11 = inlined_call_operand.hbm [shape: f32[8,32], index: 11, kind: output, shape index: {0}]
  %s12 = inlined_call_operand.hbm [shape: f32[8,32], index: 12, kind: output, shape index: {1}]
  %13 = xla_tuple %s11, %s12
  %s14 = sld [smem:[#allocation0]]
  $region86: #{tpu_custom_call.1} parent=0
    _
  %s16 = ssub.s32 1, %s14
  %s17 = scalar_select 0, %s16, %s14
  $region1: #{tpu_custom_call.1} parent=0
    #allocation2 [shape = 'u8[4096]{0}', space=vmem, size = 0x1000, scoped, tag = 'input window, operand 0, single buffered']
    #allocation3 [shape = 's32[1]{0}', space=sflag, size = 0x4, scoped, tag = 'scoped memory for tpu_custom_call.1']
    #allocation4 [shape = 's32[1]{0}', space=sflag, size = 0x4, scoped, tag = 'scoped memory for tpu_custom_call.1']
    #allocation5 [shape = 'u8[4096]{0}', space=vmem, size = 0x1000, scoped, tag = 'input window, operand 1, single buffered']
    #allocation6 [shape = 's32[1]{0}', space=sflag, size = 0x4, scoped, tag = 'scoped memory for tpu_custom_call.1']
    #allocation7 [shape = 'u8[4096]{0}', space=vmem, size = 0x1000, scoped, tag = 'input window, operand 2, single buffered']
    #allocation8 [shape = 'u8[16384]{0}', space=vmem, size = 0x4000, scoped, tag = 'input window, operand 5, single buffered']
    #allocation9 [shape = 's32[1]{0}', space=sflag, size = 0x4, scoped, tag = 'scoped memory for tpu_custom_call.1']
    #allocation10 [shape = 'u8[16384]{0}', space=vmem, size = 0x4000, scoped, tag = 'input window, operand 7, single buffered']
    #allocation11 [shape = 'u8[16384]{0}', space=vmem, size = 0x4000, scoped, tag = 'input window, operand 9, single buffered']
    #allocation12 [shape = 's32[1]{0}', space=sflag, size = 0x4, scoped, tag = 'scoped memory for tpu_custom_call.1']
    #allocation13 [shape = 'u8[4096]{0}', space=vmem, size = 0x1000, scoped, tag = 'output window, operand 0, single buffered']
    #allocation14 [shape = 'u8[4096]{0}', space=vmem, size = 0x1000, scoped, tag = 'output window, operand 1, single buffered']
    #allocation15 [shape = 's32[1]{0}', space=sflag, size = 0x4, scoped, tag = 'scoped memory for tpu_custom_call.1']
    %18 = vsyncpa [#allocation3], 0
    %19 = vsyncpa [#allocation6], 0
    %20 = vsyncpa [#allocation9], 0
    %21 = vsyncpa [#allocation12], 0
    %22 = vsyncpa [#allocation4], 0
    %23 = vsyncpa [#allocation15], 0
    // Predicated region
    $region2: #{tpu_custom_call.1} parent=1 // pred_check
      _
    $region3: #{tpu_custom_call.1} parent=1 // pred_check_branch
      %25 = sbr.rel (0) target = $region5
    $region4: #{tpu_custom_call.1} parent=1 // pred_region
      %s27 = ssub.s32 128, 128
      %28 = vsyncadd [#allocation3], %s27
      %s30 = sshll.u32 [#allocation2], 4
      %s31 = int_to_ptr.vmem [resolvable:$true] %s30
      %33 = dma.hbm_to_vmem [thread:$0]  %s0, 128, %s31, [#allocation3]
    $region5: #{tpu_custom_call.1} parent=1 // pred_fallthru
      _
    // Predicated region
    $region6: #{tpu_custom_call.1} parent=1 // pred_check
      _
    $region7: #{tpu_custom_call.1} parent=1 // pred_check_branch
      %35 = sbr.rel (0) target = $region9
    $region8: #{tpu_custom_call.1} parent=1 // pred_region
      %s37 = ssub.s32 128, 128
      %38 = vsyncadd [#allocation6], %s37
      %s40 = sshll.u32 [#allocation5], 4
      %s41 = int_to_ptr.vmem [resolvable:$true] %s40
      %43 = dma.hbm_to_vmem [thread:$0]  %s1, 128, %s41, [#allocation6]
    $region9: #{tpu_custom_call.1} parent=1 // pred_fallthru
      _
    // Predicated region
    $region10: #{tpu_custom_call.1} parent=1 // pred_check
      _
    $region11: #{tpu_custom_call.1} parent=1 // pred_check_branch
      %45 = sbr.rel (0) target = $region13
    $region12: #{tpu_custom_call.1} parent=1 // pred_region
      %s47 = ssub.s32 128, 128
      %48 = vsyncadd [#allocation6], %s47
      %s50 = sshll.u32 [#allocation7], 4
      %s51 = int_to_ptr.vmem [resolvable:$true] %s50
      %53 = dma.hbm_to_vmem [thread:$0]  %s2, 128, %s51, [#allocation6]
    $region13: #{tpu_custom_call.1} parent=1 // pred_fallthru
      _
    // Predicated region
    $region14: #{tpu_custom_call.1} parent=1 // pred_check
      _
    $region15: #{tpu_custom_call.1} parent=1 // pred_check_branch
      %55 = sbr.rel (0) target = $region17
    $region16: #{tpu_custom_call.1} parent=1 // pred_region
      _
    $region17: #{tpu_custom_call.1} parent=1 // pred_fallthru
      _
    // Predicated region
    $region18: #{tpu_custom_call.1} parent=1 // pred_check
      _
    $region19: #{tpu_custom_call.1} parent=1 // pred_check_branch
      %57 = sbr.rel (0) target = $region21
    $region20: #{tpu_custom_call.1} parent=1 // pred_region
      _
    $region21: #{tpu_custom_call.1} parent=1 // pred_fallthru
      _
    // Predicated region
    $region22: #{tpu_custom_call.1} parent=1 // pred_check
      _
    $region23: #{tpu_custom_call.1} parent=1 // pred_check_branch
      %59 = sbr.rel (0) target = $region25
    $region24: #{tpu_custom_call.1} parent=1 // pred_region
      %s61 = ssub.s32 512, 512
      %62 = vsyncadd [#allocation9], %s61
      %s63 = sshll.u32 [#allocation8], 4
      %s64 = int_to_ptr.vmem [resolvable:$true] %s63
      %69 = dma.hbm_to_vmem [thread:$0]  %s5, 512, %s64, [#allocation9], 128, 128, 8
    $region25: #{tpu_custom_call.1} parent=1 // pred_fallthru
      _
    // Predicated region
    $region26: #{tpu_custom_call.1} parent=1 // pred_check
      _
    $region27: #{tpu_custom_call.1} parent=1 // pred_check_branch
      %71 = sbr.rel (0) target = $region29
    $region28: #{tpu_custom_call.1} parent=1 // pred_region
      _
    $region29: #{tpu_custom_call.1} parent=1 // pred_fallthru
      _
    // Predicated region
    $region30: #{tpu_custom_call.1} parent=1 // pred_check
      _
    $region31: #{tpu_custom_call.1} parent=1 // pred_check_branch
      %73 = sbr.rel (0) target = $region33
    $region32: #{tpu_custom_call.1} parent=1 // pred_region
      %s75 = ssub.s32 512, 512
      %76 = vsyncadd [#allocation9], %s75
      %s77 = sshll.u32 [#allocation10], 4
      %s78 = int_to_ptr.vmem [resolvable:$true] %s77
      %83 = dma.hbm_to_vmem [thread:$0]  %s7, 512, %s78, [#allocation9], 128, 128, 8
    $region33: #{tpu_custom_call.1} parent=1 // pred_fallthru
      _
    // Predicated region
    $region34: #{tpu_custom_call.1} parent=1 // pred_check
      _
    $region35: #{tpu_custom_call.1} parent=1 // pred_check_branch
      %85 = sbr.rel (0) target = $region37
    $region36: #{tpu_custom_call.1} parent=1 // pred_region
      _
    $region37: #{tpu_custom_call.1} parent=1 // pred_fallthru
      _
    // Predicated region
    $region38: #{tpu_custom_call.1} parent=1 // pred_check
      _
    $region39: #{tpu_custom_call.1} parent=1 // pred_check_branch
      %87 = sbr.rel (0) target = $region41
    $region40: #{tpu_custom_call.1} parent=1 // pred_region
      %s89 = ssub.s32 512, 512
      %90 = vsyncadd [#allocation12], %s89
      %s91 = sshll.u32 [#allocation11], 4
      %s92 = int_to_ptr.vmem [resolvable:$true] %s91
      %97 = dma.hbm_to_vmem [thread:$0]  %s9, 512, %s92, [#allocation12], 128, 128, 8
    $region41: #{tpu_custom_call.1} parent=1 // pred_fallthru
      _
    // Predicated region
    $region42: #{tpu_custom_call.1} parent=1 // pred_check
      _
    $region43: #{tpu_custom_call.1} parent=1 // pred_check_branch
      %99 = sbr.rel (0) target = $region45
    $region44: #{tpu_custom_call.1} parent=1 // pred_region
      _
    $region45: #{tpu_custom_call.1} parent=1 // pred_fallthru
      _
    // Predicated region
    $region46: #{tpu_custom_call.1} parent=1 // pred_check
      _
    $region47: #{tpu_custom_call.1} parent=1 // pred_check_branch
      %101 = sbr.rel (0) target = $region49
    $region48: #{tpu_custom_call.1} parent=1 // pred_region
      %102 = dma.done [#allocation3], 128
    $region49: #{tpu_custom_call.1} parent=1 // pred_fallthru
      _
    // Predicated region
    $region50: #{tpu_custom_call.1} parent=1 // pred_check
      _
    $region51: #{tpu_custom_call.1} parent=1 // pred_check_branch
      %104 = sbr.rel (0) target = $region53
    $region52: #{tpu_custom_call.1} parent=1 // pred_region
      %105 = dma.done [#allocation6], 128
    $region53: #{tpu_custom_call.1} parent=1 // pred_fallthru
      _
    // Predicated region
    $region54: #{tpu_custom_call.1} parent=1 // pred_check
      _
    $region55: #{tpu_custom_call.1} parent=1 // pred_check_branch
      %107 = sbr.rel (0) target = $region57
    $region56: #{tpu_custom_call.1} parent=1 // pred_region
      %108 = dma.done [#allocation6], 128
    $region57: #{tpu_custom_call.1} parent=1 // pred_fallthru
      _
    // Predicated region
    $region58: #{tpu_custom_call.1} parent=1 // pred_check
      _
    $region59: #{tpu_custom_call.1} parent=1 // pred_check_branch
      %110 = sbr.rel (0) target = $region61
    $region60: #{tpu_custom_call.1} parent=1 // pred_region
      %111 = dma.done [#allocation9], 512
    $region61: #{tpu_custom_call.1} parent=1 // pred_fallthru
      _
    // Predicated region
    $region62: #{tpu_custom_call.1} parent=1 // pred_check
      _
    $region63: #{tpu_custom_call.1} parent=1 // pred_check_branch
      %113 = sbr.rel (0) target = $region65
    $region64: #{tpu_custom_call.1} parent=1 // pred_region
      %114 = dma.done [#allocation9], 512
    $region65: #{tpu_custom_call.1} parent=1 // pred_fallthru
      _
    // Predicated region
    $region66: #{tpu_custom_call.1} parent=1 // pred_check
      _
    $region67: #{tpu_custom_call.1} parent=1 // pred_check_branch
      %116 = sbr.rel (0) target = $region69
    $region68: #{tpu_custom_call.1} parent=1 // pred_region
      %117 = dma.done [#allocation12], 512
    $region69: #{tpu_custom_call.1} parent=1 // pred_fallthru
      _
    %v118 = vld [vmem:[#allocation2] sm:$0xff]
    %v119 = vld [vmem:[%s4] sm:$0xff]
    %v120 = vld [vmem:[%s4 + $0x8] sm:$0xff]
    %v121 = vld [vmem:[%s6] sm:$0x1]
    %v123 = vlaneseq
    %v124 = vshrl.u32 %v123, 7
    %v125 = vsub.s32 0, %v124
    %v126 = vrot.slane %v121, %v125
    %vm128 = vcmask 130048
    %v130 = vsel %vm128, %v118, 0
    %132 = vmatprep.subr.mxu0 0.0
    %133 = vmatpush1.msra.mxu0 0.0
    %134 = vmatprep.subr.mxu0 0.0
    %135 = vmatpush1.msra.mxu0 0.0
    %136 = vmatprep.subr.mxu0 0.0
    %137 = vmatpush1.msra.mxu0 0.0
    %138 = vmatprep.subr.mxu0 0.0
    %139 = vmatpush1.msra.mxu0 0.0
    %140 = vmatprep.subr.mxu0 0.0
    %141 = vmatpush1.msra.mxu0 0.0
    %142 = vmatprep.subr.mxu0 0.0
    %143 = vmatpush1.msra.mxu0 0.0
    %144 = vmatprep.subr.mxu0 0.0
    %145 = vmatpush1.msra.mxu0 0.0
    %146 = vmatprep.subr.mxu0 0.0
    %147 = vmatpush1.msra.mxu0 0.0
    %148 = vmatprep.subr.mxu0 0.0
    %149 = vmatpush1.msra.mxu0 0.0
    %150 = vmatprep.subr.mxu0 0.0
    %151 = vmatpush1.msra.mxu0 0.0
    %152 = vmatprep.subr.mxu0 0.0
    %153 = vmatpush1.msra.mxu0 0.0
    %154 = vmatprep.subr.mxu0 0.0
    %155 = vmatpush1.msra.mxu0 0.0
    %156 = vmatprep.subr.mxu0 0.0
    %157 = vmatpush1.msra.mxu0 0.0
    %158 = vmatprep.subr.mxu0 0.0
    %159 = vmatpush1.msra.mxu0 0.0
    %160 = vmatprep.subr.mxu0 0.0
    %161 = vmatpush1.msra.mxu0 %v120
    %162 = vmatprep.subr.mxu0 0.0
    %163 = vmatpush1.msra.mxu0 %v119
    %164 = vmatprep.subr.mxu0 0.0
    %165 = vmatpush2.msra.mxu0 0.0
    %166 = vmatprep.subr.mxu0 0.0
    %167 = vmatpush2.msra.mxu0 0.0
    %168 = vmatprep.subr.mxu0 0.0
    %169 = vmatpush2.msra.mxu0 0.0
    %170 = vmatprep.subr.mxu0 0.0
    %171 = vmatpush2.msra.mxu0 0.0
    %172 = vmatprep.subr.mxu0 0.0
    %173 = vmatpush2.msra.mxu0 0.0
    %174 = vmatprep.subr.mxu0 0.0
    %175 = vmatpush2.msra.mxu0 0.0
    %176 = vmatprep.subr.mxu0 0.0
    %177 = vmatpush2.msra.mxu0 0.0
    %178 = vmatprep.subr.mxu0 0.0
    %179 = vmatpush2.msra.mxu0 0.0
    %180 = vmatprep.subr.mxu0 0.0
    %181 = vmatpush2.msra.mxu0 0.0
    %182 = vmatprep.subr.mxu0 0.0
    %183 = vmatpush2.msra.mxu0 0.0
    %184 = vmatprep.subr.mxu0 0.0
    %185 = vmatpush2.msra.mxu0 0.0
    %186 = vmatprep.subr.mxu0 0.0
    %187 = vmatpush2.msra.mxu0 0.0
    %188 = vmatprep.subr.mxu0 0.0
    %189 = vmatpush2.msra.mxu0 0.0
    %190 = vmatprep.subr.mxu0 0.0
    %191 = vmatpush2.msra.mxu0 0.0
    %192 = vmatprep.subr.mxu0 0.0
    %193 = vmatpush2.msra.mxu0 0.0
    %194 = vmatprep.subr.mxu0 0.0
    %195 = vmatpush2.msra.mxu0 0.0
    %196 = vmatprep.mubr.f32.mxu0 0.0
    %197 = vmatmul.mubr.f32.gmra.mxu0 %v130
    %v198 = vpop.f32.mrf.mxu0
    %v199 = vadd.f32 %v126, %v198
    %v200 = vpop.f32.mrf.mxu0
    %201 = vdwg.mxu0
    %v202 = vld [vmem:[#allocation5] sm:$0xff]
    %v203 = vld [vmem:[#allocation7] sm:$0xff]
    %v204 = vld [vmem:[#allocation8] sm:$0xff]
    %v205 = vld [vmem:[#allocation8 + $0x8] sm:$0xff]
    %v206 = vld [vmem:[#allocation8 + $0x10] sm:$0xff]
    %v207 = vld [vmem:[#allocation8 + $0x18] sm:$0xff]
    %vm208 = vcmask 261120
    %v210 = vsel %vm208, %v202, 0
    %212 = vmatprep.subr.mxu0 0.0
    %213 = vmatpush1.msra.mxu0 0.0
    %214 = vmatprep.subr.mxu0 0.0
    %215 = vmatpush1.msra.mxu0 0.0
    %216 = vmatprep.subr.mxu0 0.0
    %217 = vmatpush1.msra.mxu0 0.0
    %218 = vmatprep.subr.mxu0 0.0
    %219 = vmatpush1.msra.mxu0 0.0
    %220 = vmatprep.subr.mxu0 0.0
    %221 = vmatpush1.msra.mxu0 0.0
    %222 = vmatprep.subr.mxu0 0.0
    %223 = vmatpush1.msra.mxu0 0.0
    %224 = vmatprep.subr.mxu0 0.0
    %225 = vmatpush1.msra.mxu0 0.0
    %226 = vmatprep.subr.mxu0 0.0
    %227 = vmatpush1.msra.mxu0 0.0
    %228 = vmatprep.subr.mxu0 0.0
    %229 = vmatpush1.msra.mxu0 0.0
    %230 = vmatprep.subr.mxu0 0.0
    %231 = vmatpush1.msra.mxu0 0.0
    %232 = vmatprep.subr.mxu0 0.0
    %233 = vmatpush1.msra.mxu0 0.0
    %234 = vmatprep.subr.mxu0 0.0
    %235 = vmatpush1.msra.mxu0 0.0
    %236 = vmatprep.subr.mxu0 0.0
    %237 = vmatpush1.msra.mxu0 %v207
    %238 = vmatprep.subr.mxu0 0.0
    %239 = vmatpush1.msra.mxu0 %v206
    %240 = vmatprep.subr.mxu0 0.0
    %241 = vmatpush1.msra.mxu0 %v205
    %242 = vmatprep.subr.mxu0 0.0
    %243 = vmatpush1.msra.mxu0 %v204
    %244 = vmatprep.subr.mxu0 0.0
    %245 = vmatpush2.msra.mxu0 0.0
    %246 = vmatprep.subr.mxu0 0.0
    %247 = vmatpush2.msra.mxu0 0.0
    %248 = vmatprep.subr.mxu0 0.0
    %249 = vmatpush2.msra.mxu0 0.0
    %250 = vmatprep.subr.mxu0 0.0
    %251 = vmatpush2.msra.mxu0 0.0
    %252 = vmatprep.subr.mxu0 0.0
    %253 = vmatpush2.msra.mxu0 0.0
    %254 = vmatprep.subr.mxu0 0.0
    %255 = vmatpush2.msra.mxu0 0.0
    %256 = vmatprep.subr.mxu0 0.0
    %257 = vmatpush2.msra.mxu0 0.0
    %258 = vmatprep.subr.mxu0 0.0
    %259 = vmatpush2.msra.mxu0 0.0
    %260 = vmatprep.subr.mxu0 0.0
    %261 = vmatpush2.msra.mxu0 0.0
    %262 = vmatprep.subr.mxu0 0.0
    %263 = vmatpush2.msra.mxu0 0.0
    %264 = vmatprep.subr.mxu0 0.0
    %265 = vmatpush2.msra.mxu0 0.0
    %266 = vmatprep.subr.mxu0 0.0
    %267 = vmatpush2.msra.mxu0 0.0
    %268 = vmatprep.subr.mxu0 0.0
    %269 = vmatpush2.msra.mxu0 0.0
    %270 = vmatprep.subr.mxu0 0.0
    %271 = vmatpush2.msra.mxu0 0.0
    %272 = vmatprep.subr.mxu0 0.0
    %273 = vmatpush2.msra.mxu0 0.0
    %274 = vmatprep.subr.mxu0 0.0
    %275 = vmatpush2.msra.mxu0 0.0
    %276 = vmatprep.mubr.f32.mxu0 0.0
    %277 = vmatmul.mubr.f32.gmra.mxu0 %v210
    %v278 = vpop.f32.mrf.mxu0
    %v279 = vadd.f32 0.0, %v278
    %v280 = vpop.f32.mrf.mxu0
    %281 = vdwg.mxu0
    %v282 = vadd.f32 %v199, %v279
    %v283 = vxor.u32 %v282, 2147483648
    %v284 = vmul.f32 %v283, 1.442695
    %v285 = vpow.pop %v284
    %v286 = vadd.f32 %v285, 1.0
    %v287 = vrcp.pop %v286
    %v288 = vmul.f32 1.0, %v287
    %v289 = vtanh.pop %v282
    %291 = vrot.lane.b32.xlu0 %v203, 32
    %v292 = vpop.permute.xlu0 %291
    %v294 = vmul.f32 %v288, %v292
    %296 = vrot.lane.b32.xlu0 %v289, 64
    %v297 = vpop.permute.xlu0 %296
    %v299 = vmul.f32 %v288, %v297
    %301 = vrot.lane.b32.xlu0 %v299, 32
    %v302 = vpop.permute.xlu0 %301
    %v304 = vadd.f32 %v294, %v302
    %v305 = vtanh.pop %v304
    %307 = vrot.lane.b32.xlu0 %v305, 64
    %v308 = vpop.permute.xlu0 %307
    %v310 = vmul.f32 %v288, %v308
    %312 = vrot.lane.b32.xlu0 %v310, 32
    %v313 = vpop.permute.xlu0 %312
    %v314 = vsel %vm208, %v313, 0
    %316 = vmatprep.subr.mxu0 0.0
    %317 = vmatpush1.msra.mxu0 0.0
    %318 = vmatprep.subr.mxu0 0.0
    %319 = vmatpush1.msra.mxu0 0.0
    %320 = vmatprep.subr.mxu0 0.0
    %321 = vmatpush1.msra.mxu0 0.0
    %322 = vmatprep.subr.mxu0 0.0
    %323 = vmatpush1.msra.mxu0 0.0
    %324 = vmatprep.subr.mxu0 0.0
    %325 = vmatpush1.msra.mxu0 0.0
    %326 = vmatprep.subr.mxu0 0.0
    %327 = vmatpush1.msra.mxu0 0.0
    %328 = vmatprep.subr.mxu0 0.0
    %329 = vmatpush1.msra.mxu0 0.0
    %330 = vmatprep.subr.mxu0 0.0
    %331 = vmatpush1.msra.mxu0 0.0
    %332 = vmatprep.subr.mxu0 0.0
    %333 = vmatpush1.msra.mxu0 0.0
    %334 = vmatprep.subr.mxu0 0.0
    %335 = vmatpush1.msra.mxu0 0.0
    %336 = vmatprep.subr.mxu0 0.0
    %337 = vmatpush1.msra.mxu0 0.0
    %338 = vmatprep.subr.mxu0 0.0
    %339 = vmatpush1.msra.mxu0 0.0
    %340 = vmatprep.subr.mxu0 0.0
    %341 = vmatpush1.msra.mxu0 %v207
    %342 = vmatprep.subr.mxu0 0.0
    %343 = vmatpush1.msra.mxu0 %v206
    %344 = vmatprep.subr.mxu0 0.0
    %345 = vmatpush1.msra.mxu0 %v205
    %346 = vmatprep.subr.mxu0 0.0
    %347 = vmatpush1.msra.mxu0 %v204
    %348 = vmatprep.subr.mxu0 0.0
    %349 = vmatpush2.msra.mxu0 0.0
    %350 = vmatprep.subr.mxu0 0.0
    %351 = vmatpush2.msra.mxu0 0.0
    %352 = vmatprep.subr.mxu0 0.0
    %353 = vmatpush2.msra.mxu0 0.0
    %354 = vmatprep.subr.mxu0 0.0
    %355 = vmatpush2.msra.mxu0 0.0
    %356 = vmatprep.subr.mxu0 0.0
    %357 = vmatpush2.msra.mxu0 0.0
    %358 = vmatprep.subr.mxu0 0.0
    %359 = vmatpush2.msra.mxu0 0.0
    %360 = vmatprep.subr.mxu0 0.0
    %361 = vmatpush2.msra.mxu0 0.0
    %362 = vmatprep.subr.mxu0 0.0
    %363 = vmatpush2.msra.mxu0 0.0
    %364 = vmatprep.subr.mxu0 0.0
    %365 = vmatpush2.msra.mxu0 0.0
    %366 = vmatprep.subr.mxu0 0.0
    %367 = vmatpush2.msra.mxu0 0.0
    %368 = vmatprep.subr.mxu0 0.0
    %369 = vmatpush2.msra.mxu0 0.0
    %370 = vmatprep.subr.mxu0 0.0
    %371 = vmatpush2.msra.mxu0 0.0
    %372 = vmatprep.subr.mxu0 0.0
    %373 = vmatpush2.msra.mxu0 0.0
    %374 = vmatprep.subr.mxu0 0.0
    %375 = vmatpush2.msra.mxu0 0.0
    %376 = vmatprep.subr.mxu0 0.0
    %377 = vmatpush2.msra.mxu0 0.0
    %378 = vmatprep.subr.mxu0 0.0
    %379 = vmatpush2.msra.mxu0 0.0
    %380 = vmatprep.mubr.f32.mxu0 0.0
    %381 = vmatmul.mubr.f32.gmra.mxu0 %v314
    %v382 = vpop.f32.mrf.mxu0
    %v383 = vadd.f32 0.0, %v382
    %v384 = vpop.f32.mrf.mxu0
    %385 = vdwg.mxu0
    %v386 = vadd.f32 %v199, %v383
    %v387 = vxor.u32 %v386, 2147483648
    %v388 = vmul.f32 %v387, 1.442695
    %v389 = vpow.pop %v388
    %v390 = vadd.f32 %v389, 1.0
    %v391 = vrcp.pop %v390
    %v392 = vmul.f32 1.0, %v391
    %v393 = vtanh.pop %v386
    %v394 = vmul.f32 %v392, %v304
    %396 = vrot.lane.b32.xlu0 %v393, 64
    %v397 = vpop.permute.xlu0 %396
    %v399 = vmul.f32 %v392, %v397
    %401 = vrot.lane.b32.xlu0 %v399, 32
    %v402 = vpop.permute.xlu0 %401
    %v404 = vadd.f32 %v394, %v402
    %v405 = vtanh.pop %v404
    %407 = vrot.lane.b32.xlu0 %v405, 64
    %v408 = vpop.permute.xlu0 %407
    %v410 = vmul.f32 %v392, %v408
    %v411 = vld [vmem:[%s3] sm:$0xff]
    %v412 = vld [vmem:[#allocation10] sm:$0xff]
    %v413 = vld [vmem:[#allocation10 + $0x8] sm:$0xff]
    %v414 = vld [vmem:[#allocation10 + $0x10] sm:$0xff]
    %v415 = vld [vmem:[#allocation10 + $0x18] sm:$0xff]
    %v416 = vld [vmem:[%s8] sm:$0x1]
    %v418 = vlaneseq
    %v419 = vshrl.u32 %v418, 7
    %v420 = vsub.s32 0, %v419
    %v421 = vrot.slane %v416, %v420
    %424 = vrot.lane.b32.xlu0 %v410, 32
    %v425 = vpop.permute.xlu0 %424
    %v426 = vsel %vm208, %v425, 0
    %428 = vmatprep.subr.mxu0 0.0
    %429 = vmatpush1.msra.mxu0 0.0
    %430 = vmatprep.subr.mxu0 0.0
    %431 = vmatpush1.msra.mxu0 0.0
    %432 = vmatprep.subr.mxu0 0.0
    %433 = vmatpush1.msra.mxu0 0.0
    %434 = vmatprep.subr.mxu0 0.0
    %435 = vmatpush1.msra.mxu0 0.0
    %436 = vmatprep.subr.mxu0 0.0
    %437 = vmatpush1.msra.mxu0 0.0
    %438 = vmatprep.subr.mxu0 0.0
    %439 = vmatpush1.msra.mxu0 0.0
    %440 = vmatprep.subr.mxu0 0.0
    %441 = vmatpush1.msra.mxu0 0.0
    %442 = vmatprep.subr.mxu0 0.0
    %443 = vmatpush1.msra.mxu0 0.0
    %444 = vmatprep.subr.mxu0 0.0
    %445 = vmatpush1.msra.mxu0 0.0
    %446 = vmatprep.subr.mxu0 0.0
    %447 = vmatpush1.msra.mxu0 0.0
    %448 = vmatprep.subr.mxu0 0.0
    %449 = vmatpush1.msra.mxu0 0.0
    %450 = vmatprep.subr.mxu0 0.0
    %451 = vmatpush1.msra.mxu0 0.0
    %452 = vmatprep.subr.mxu0 0.0
    %453 = vmatpush1.msra.mxu0 %v415
    %454 = vmatprep.subr.mxu0 0.0
    %455 = vmatpush1.msra.mxu0 %v414
    %456 = vmatprep.subr.mxu0 0.0
    %457 = vmatpush1.msra.mxu0 %v413
    %458 = vmatprep.subr.mxu0 0.0
    %459 = vmatpush1.msra.mxu0 %v412
    %460 = vmatprep.subr.mxu0 0.0
    %461 = vmatpush2.msra.mxu0 0.0
    %462 = vmatprep.subr.mxu0 0.0
    %463 = vmatpush2.msra.mxu0 0.0
    %464 = vmatprep.subr.mxu0 0.0
    %465 = vmatpush2.msra.mxu0 0.0
    %466 = vmatprep.subr.mxu0 0.0
    %467 = vmatpush2.msra.mxu0 0.0
    %468 = vmatprep.subr.mxu0 0.0
    %469 = vmatpush2.msra.mxu0 0.0
    %470 = vmatprep.subr.mxu0 0.0
    %471 = vmatpush2.msra.mxu0 0.0
    %472 = vmatprep.subr.mxu0 0.0
    %473 = vmatpush2.msra.mxu0 0.0
    %474 = vmatprep.subr.mxu0 0.0
    %475 = vmatpush2.msra.mxu0 0.0
    %476 = vmatprep.subr.mxu0 0.0
    %477 = vmatpush2.msra.mxu0 0.0
    %478 = vmatprep.subr.mxu0 0.0
    %479 = vmatpush2.msra.mxu0 0.0
    %480 = vmatprep.subr.mxu0 0.0
    %481 = vmatpush2.msra.mxu0 0.0
    %482 = vmatprep.subr.mxu0 0.0
    %483 = vmatpush2.msra.mxu0 0.0
    %484 = vmatprep.subr.mxu0 0.0
    %485 = vmatpush2.msra.mxu0 0.0
    %486 = vmatprep.subr.mxu0 0.0
    %487 = vmatpush2.msra.mxu0 0.0
    %488 = vmatprep.subr.mxu0 0.0
    %489 = vmatpush2.msra.mxu0 0.0
    %490 = vmatprep.subr.mxu0 0.0
    %491 = vmatpush2.msra.mxu0 0.0
    %492 = vmatprep.mubr.f32.mxu0 0.0
    %493 = vmatmul.mubr.f32.gmra.mxu0 %v426
    %v494 = vpop.f32.mrf.mxu0
    %v495 = vadd.f32 %v421, %v494
    %v496 = vpop.f32.mrf.mxu0
    %497 = vdwg.mxu0
    %v498 = vtanh.pop %v495
    %v499 = vld [vmem:[#allocation11] sm:$0xff]
    %v500 = vld [vmem:[#allocation11 + $0x8] sm:$0xff]
    %v501 = vld [vmem:[#allocation11 + $0x10] sm:$0xff]
    %v502 = vld [vmem:[#allocation11 + $0x18] sm:$0xff]
    %v503 = vld [vmem:[%s10] sm:$0x1]
    %v505 = vlaneseq
    %v506 = vshrl.u32 %v505, 7
    %v507 = vsub.s32 0, %v506
    %v508 = vrot.slane %v503, %v507
    %v511 = vsel %vm208, %v498, 0
    %513 = vmatprep.subr.mxu0 0.0
    %514 = vmatpush1.msra.mxu0 0.0
    %515 = vmatprep.subr.mxu0 0.0
    %516 = vmatpush1.msra.mxu0 0.0
    %517 = vmatprep.subr.mxu0 0.0
    %518 = vmatpush1.msra.mxu0 0.0
    %519 = vmatprep.subr.mxu0 0.0
    %520 = vmatpush1.msra.mxu0 0.0
    %521 = vmatprep.subr.mxu0 0.0
    %522 = vmatpush1.msra.mxu0 0.0
    %523 = vmatprep.subr.mxu0 0.0
    %524 = vmatpush1.msra.mxu0 0.0
    %525 = vmatprep.subr.mxu0 0.0
    %526 = vmatpush1.msra.mxu0 0.0
    %527 = vmatprep.subr.mxu0 0.0
    %528 = vmatpush1.msra.mxu0 0.0
    %529 = vmatprep.subr.mxu0 0.0
    %530 = vmatpush1.msra.mxu0 0.0
    %531 = vmatprep.subr.mxu0 0.0
    %532 = vmatpush1.msra.mxu0 0.0
    %533 = vmatprep.subr.mxu0 0.0
    %534 = vmatpush1.msra.mxu0 0.0
    %535 = vmatprep.subr.mxu0 0.0
    %536 = vmatpush1.msra.mxu0 0.0
    %537 = vmatprep.subr.mxu0 0.0
    %538 = vmatpush1.msra.mxu0 %v502
    %539 = vmatprep.subr.mxu0 0.0
    %540 = vmatpush1.msra.mxu0 %v501
    %541 = vmatprep.subr.mxu0 0.0
    %542 = vmatpush1.msra.mxu0 %v500
    %543 = vmatprep.subr.mxu0 0.0
    %544 = vmatpush1.msra.mxu0 %v499
    %545 = vmatprep.subr.mxu0 0.0
    %546 = vmatpush2.msra.mxu0 0.0
    %547 = vmatprep.subr.mxu0 0.0
    %548 = vmatpush2.msra.mxu0 0.0
    %549 = vmatprep.subr.mxu0 0.0
    %550 = vmatpush2.msra.mxu0 0.0
    %551 = vmatprep.subr.mxu0 0.0
    %552 = vmatpush2.msra.mxu0 0.0
    %553 = vmatprep.subr.mxu0 0.0
    %554 = vmatpush2.msra.mxu0 0.0
    %555 = vmatprep.subr.mxu0 0.0
    %556 = vmatpush2.msra.mxu0 0.0
    %557 = vmatprep.subr.mxu0 0.0
    %558 = vmatpush2.msra.mxu0 0.0
    %559 = vmatprep.subr.mxu0 0.0
    %560 = vmatpush2.msra.mxu0 0.0
    %561 = vmatprep.subr.mxu0 0.0
    %562 = vmatpush2.msra.mxu0 0.0
    %563 = vmatprep.subr.mxu0 0.0
    %564 = vmatpush2.msra.mxu0 0.0
    %565 = vmatprep.subr.mxu0 0.0
    %566 = vmatpush2.msra.mxu0 0.0
    %567 = vmatprep.subr.mxu0 0.0
    %568 = vmatpush2.msra.mxu0 0.0
    %569 = vmatprep.subr.mxu0 0.0
    %570 = vmatpush2.msra.mxu0 0.0
    %571 = vmatprep.subr.mxu0 0.0
    %572 = vmatpush2.msra.mxu0 0.0
    %573 = vmatprep.subr.mxu0 0.0
    %574 = vmatpush2.msra.mxu0 0.0
    %575 = vmatprep.subr.mxu0 0.0
    %576 = vmatpush2.msra.mxu0 0.0
    %577 = vmatprep.mubr.f32.mxu0 0.0
    %578 = vmatmul.mubr.f32.gmra.mxu0 %v511
    %v579 = vpop.f32.mrf.mxu0
    %v580 = vadd.f32 %v508, %v579
    %v581 = vpop.f32.mrf.mxu0
    %582 = vdwg.mxu0
    %v583 = vmul.f32 %v411, 0.5
    %585 = vset.pattern.permute.xlu0 0
    %586 = vperm.xlu0 %585, %v583
    %v587 = vpop.permute.xlu0 %586
    %v589 = vmul.f32 %v587, %v580
    %591 = vrot.lane.b32.xlu0 %v589, 96
    %v592 = vpop.permute.xlu0 %591
    %v594 = vadd.f32 %v410, %v592
    %596 = vrot.lane.b32.xlu0 %v594, 32
    %v597 = vpop.permute.xlu0 %596
    %v598 = vsel %vm208, %v597, 0
    %600 = vmatprep.subr.mxu0 0.0
    %601 = vmatpush1.msra.mxu0 0.0
    %602 = vmatprep.subr.mxu0 0.0
    %603 = vmatpush1.msra.mxu0 0.0
    %604 = vmatprep.subr.mxu0 0.0
    %605 = vmatpush1.msra.mxu0 0.0
    %606 = vmatprep.subr.mxu0 0.0
    %607 = vmatpush1.msra.mxu0 0.0
    %608 = vmatprep.subr.mxu0 0.0
    %609 = vmatpush1.msra.mxu0 0.0
    %610 = vmatprep.subr.mxu0 0.0
    %611 = vmatpush1.msra.mxu0 0.0
    %612 = vmatprep.subr.mxu0 0.0
    %613 = vmatpush1.msra.mxu0 0.0
    %614 = vmatprep.subr.mxu0 0.0
    %615 = vmatpush1.msra.mxu0 0.0
    %616 = vmatprep.subr.mxu0 0.0
    %617 = vmatpush1.msra.mxu0 0.0
    %618 = vmatprep.subr.mxu0 0.0
    %619 = vmatpush1.msra.mxu0 0.0
    %620 = vmatprep.subr.mxu0 0.0
    %621 = vmatpush1.msra.mxu0 0.0
    %622 = vmatprep.subr.mxu0 0.0
    %623 = vmatpush1.msra.mxu0 0.0
    %624 = vmatprep.subr.mxu0 0.0
    %625 = vmatpush1.msra.mxu0 %v415
    %626 = vmatprep.subr.mxu0 0.0
    %627 = vmatpush1.msra.mxu0 %v414
    %628 = vmatprep.subr.mxu0 0.0
    %629 = vmatpush1.msra.mxu0 %v413
    %630 = vmatprep.subr.mxu0 0.0
    %631 = vmatpush1.msra.mxu0 %v412
    %632 = vmatprep.subr.mxu0 0.0
    %633 = vmatpush2.msra.mxu0 0.0
    %634 = vmatprep.subr.mxu0 0.0
    %635 = vmatpush2.msra.mxu0 0.0
    %636 = vmatprep.subr.mxu0 0.0
    %637 = vmatpush2.msra.mxu0 0.0
    %638 = vmatprep.subr.mxu0 0.0
    %639 = vmatpush2.msra.mxu0 0.0
    %640 = vmatprep.subr.mxu0 0.0
    %641 = vmatpush2.msra.mxu0 0.0
    %642 = vmatprep.subr.mxu0 0.0
    %643 = vmatpush2.msra.mxu0 0.0
    %644 = vmatprep.subr.mxu0 0.0
    %645 = vmatpush2.msra.mxu0 0.0
    %646 = vmatprep.subr.mxu0 0.0
    %647 = vmatpush2.msra.mxu0 0.0
    %648 = vmatprep.subr.mxu0 0.0
    %649 = vmatpush2.msra.mxu0 0.0
    %650 = vmatprep.subr.mxu0 0.0
    %651 = vmatpush2.msra.mxu0 0.0
    %652 = vmatprep.subr.mxu0 0.0
    %653 = vmatpush2.msra.mxu0 0.0
    %654 = vmatprep.subr.mxu0 0.0
    %655 = vmatpush2.msra.mxu0 0.0
    %656 = vmatprep.subr.mxu0 0.0
    %657 = vmatpush2.msra.mxu0 0.0
    %658 = vmatprep.subr.mxu0 0.0
    %659 = vmatpush2.msra.mxu0 0.0
    %660 = vmatprep.subr.mxu0 0.0
    %661 = vmatpush2.msra.mxu0 0.0
    %662 = vmatprep.subr.mxu0 0.0
    %663 = vmatpush2.msra.mxu0 0.0
    %664 = vmatprep.mubr.f32.mxu0 0.0
    %665 = vmatmul.mubr.f32.gmra.mxu0 %v598
    %v666 = vpop.f32.mrf.mxu0
    %v667 = vadd.f32 %v421, %v666
    %v668 = vpop.f32.mrf.mxu0
    %669 = vdwg.mxu0
    %v670 = vtanh.pop %v667
    %v672 = vsel %vm208, %v670, 0
    %674 = vmatprep.subr.mxu0 0.0
    %675 = vmatpush1.msra.mxu0 0.0
    %676 = vmatprep.subr.mxu0 0.0
    %677 = vmatpush1.msra.mxu0 0.0
    %678 = vmatprep.subr.mxu0 0.0
    %679 = vmatpush1.msra.mxu0 0.0
    %680 = vmatprep.subr.mxu0 0.0
    %681 = vmatpush1.msra.mxu0 0.0
    %682 = vmatprep.subr.mxu0 0.0
    %683 = vmatpush1.msra.mxu0 0.0
    %684 = vmatprep.subr.mxu0 0.0
    %685 = vmatpush1.msra.mxu0 0.0
    %686 = vmatprep.subr.mxu0 0.0
    %687 = vmatpush1.msra.mxu0 0.0
    %688 = vmatprep.subr.mxu0 0.0
    %689 = vmatpush1.msra.mxu0 0.0
    %690 = vmatprep.subr.mxu0 0.0
    %691 = vmatpush1.msra.mxu0 0.0
    %692 = vmatprep.subr.mxu0 0.0
    %693 = vmatpush1.msra.mxu0 0.0
    %694 = vmatprep.subr.mxu0 0.0
    %695 = vmatpush1.msra.mxu0 0.0
    %696 = vmatprep.subr.mxu0 0.0
    %697 = vmatpush1.msra.mxu0 0.0
    %698 = vmatprep.subr.mxu0 0.0
    %699 = vmatpush1.msra.mxu0 %v502
    %700 = vmatprep.subr.mxu0 0.0
    %701 = vmatpush1.msra.mxu0 %v501
    %702 = vmatprep.subr.mxu0 0.0
    %703 = vmatpush1.msra.mxu0 %v500
    %704 = vmatprep.subr.mxu0 0.0
    %705 = vmatpush1.msra.mxu0 %v499
    %706 = vmatprep.subr.mxu0 0.0
    %707 = vmatpush2.msra.mxu0 0.0
    %708 = vmatprep.subr.mxu0 0.0
    %709 = vmatpush2.msra.mxu0 0.0
    %710 = vmatprep.subr.mxu0 0.0
    %711 = vmatpush2.msra.mxu0 0.0
    %712 = vmatprep.subr.mxu0 0.0
    %713 = vmatpush2.msra.mxu0 0.0
    %714 = vmatprep.subr.mxu0 0.0
    %715 = vmatpush2.msra.mxu0 0.0
    %716 = vmatprep.subr.mxu0 0.0
    %717 = vmatpush2.msra.mxu0 0.0
    %718 = vmatprep.subr.mxu0 0.0
    %719 = vmatpush2.msra.mxu0 0.0
    %720 = vmatprep.subr.mxu0 0.0
    %721 = vmatpush2.msra.mxu0 0.0
    %722 = vmatprep.subr.mxu0 0.0
    %723 = vmatpush2.msra.mxu0 0.0
    %724 = vmatprep.subr.mxu0 0.0
    %725 = vmatpush2.msra.mxu0 0.0
    %726 = vmatprep.subr.mxu0 0.0
    %727 = vmatpush2.msra.mxu0 0.0
    %728 = vmatprep.subr.mxu0 0.0
    %729 = vmatpush2.msra.mxu0 0.0
    %730 = vmatprep.subr.mxu0 0.0
    %731 = vmatpush2.msra.mxu0 0.0
    %732 = vmatprep.subr.mxu0 0.0
    %733 = vmatpush2.msra.mxu0 0.0
    %734 = vmatprep.subr.mxu0 0.0
    %735 = vmatpush2.msra.mxu0 0.0
    %736 = vmatprep.subr.mxu0 0.0
    %737 = vmatpush2.msra.mxu0 0.0
    %738 = vmatprep.mubr.f32.mxu0 0.0
    %739 = vmatmul.mubr.f32.gmra.mxu0 %v672
    %v740 = vpop.f32.mrf.mxu0
    %v741 = vadd.f32 %v508, %v740
    %v742 = vpop.f32.mrf.mxu0
    %743 = vdwg.mxu0
    %v744 = vmul.f32 %v587, %v741
    %746 = vrot.lane.b32.xlu0 %v744, 96
    %v747 = vpop.permute.xlu0 %746
    %v749 = vadd.f32 %v410, %v747
    %751 = vrot.lane.b32.xlu0 %v749, 32
    %v752 = vpop.permute.xlu0 %751
    %v753 = vsel %vm208, %v752, 0
    %755 = vmatprep.subr.mxu0 0.0
    %756 = vmatpush1.msra.mxu0 0.0
    %757 = vmatprep.subr.mxu0 0.0
    %758 = vmatpush1.msra.mxu0 0.0
    %759 = vmatprep.subr.mxu0 0.0
    %760 = vmatpush1.msra.mxu0 0.0
    %761 = vmatprep.subr.mxu0 0.0
    %762 = vmatpush1.msra.mxu0 0.0
    %763 = vmatprep.subr.mxu0 0.0
    %764 = vmatpush1.msra.mxu0 0.0
    %765 = vmatprep.subr.mxu0 0.0
    %766 = vmatpush1.msra.mxu0 0.0
    %767 = vmatprep.subr.mxu0 0.0
    %768 = vmatpush1.msra.mxu0 0.0
    %769 = vmatprep.subr.mxu0 0.0
    %770 = vmatpush1.msra.mxu0 0.0
    %771 = vmatprep.subr.mxu0 0.0
    %772 = vmatpush1.msra.mxu0 0.0
    %773 = vmatprep.subr.mxu0 0.0
    %774 = vmatpush1.msra.mxu0 0.0
    %775 = vmatprep.subr.mxu0 0.0
    %776 = vmatpush1.msra.mxu0 0.0
    %777 = vmatprep.subr.mxu0 0.0
    %778 = vmatpush1.msra.mxu0 0.0
    %779 = vmatprep.subr.mxu0 0.0
    %780 = vmatpush1.msra.mxu0 %v415
    %781 = vmatprep.subr.mxu0 0.0
    %782 = vmatpush1.msra.mxu0 %v414
    %783 = vmatprep.subr.mxu0 0.0
    %784 = vmatpush1.msra.mxu0 %v413
    %785 = vmatprep.subr.mxu0 0.0
    %786 = vmatpush1.msra.mxu0 %v412
    %787 = vmatprep.subr.mxu0 0.0
    %788 = vmatpush2.msra.mxu0 0.0
    %789 = vmatprep.subr.mxu0 0.0
    %790 = vmatpush2.msra.mxu0 0.0
    %791 = vmatprep.subr.mxu0 0.0
    %792 = vmatpush2.msra.mxu0 0.0
    %793 = vmatprep.subr.mxu0 0.0
    %794 = vmatpush2.msra.mxu0 0.0
    %795 = vmatprep.subr.mxu0 0.0
    %796 = vmatpush2.msra.mxu0 0.0
    %797 = vmatprep.subr.mxu0 0.0
    %798 = vmatpush2.msra.mxu0 0.0
    %799 = vmatprep.subr.mxu0 0.0
    %800 = vmatpush2.msra.mxu0 0.0
    %801 = vmatprep.subr.mxu0 0.0
    %802 = vmatpush2.msra.mxu0 0.0
    %803 = vmatprep.subr.mxu0 0.0
    %804 = vmatpush2.msra.mxu0 0.0
    %805 = vmatprep.subr.mxu0 0.0
    %806 = vmatpush2.msra.mxu0 0.0
    %807 = vmatprep.subr.mxu0 0.0
    %808 = vmatpush2.msra.mxu0 0.0
    %809 = vmatprep.subr.mxu0 0.0
    %810 = vmatpush2.msra.mxu0 0.0
    %811 = vmatprep.subr.mxu0 0.0
    %812 = vmatpush2.msra.mxu0 0.0
    %813 = vmatprep.subr.mxu0 0.0
    %814 = vmatpush2.msra.mxu0 0.0
    %815 = vmatprep.subr.mxu0 0.0
    %816 = vmatpush2.msra.mxu0 0.0
    %817 = vmatprep.subr.mxu0 0.0
    %818 = vmatpush2.msra.mxu0 0.0
    %819 = vmatprep.mubr.f32.mxu0 0.0
    %820 = vmatmul.mubr.f32.gmra.mxu0 %v753
    %v821 = vpop.f32.mrf.mxu0
    %v822 = vadd.f32 %v421, %v821
    %v823 = vpop.f32.mrf.mxu0
    %824 = vdwg.mxu0
    %v825 = vtanh.pop %v822
    %v827 = vsel %vm208, %v825, 0
    %829 = vmatprep.subr.mxu0 0.0
    %830 = vmatpush1.msra.mxu0 0.0
    %831 = vmatprep.subr.mxu0 0.0
    %832 = vmatpush1.msra.mxu0 0.0
    %833 = vmatprep.subr.mxu0 0.0
    %834 = vmatpush1.msra.mxu0 0.0
    %835 = vmatprep.subr.mxu0 0.0
    %836 = vmatpush1.msra.mxu0 0.0
    %837 = vmatprep.subr.mxu0 0.0
    %838 = vmatpush1.msra.mxu0 0.0
    %839 = vmatprep.subr.mxu0 0.0
    %840 = vmatpush1.msra.mxu0 0.0
    %841 = vmatprep.subr.mxu0 0.0
    %842 = vmatpush1.msra.mxu0 0.0
    %843 = vmatprep.subr.mxu0 0.0
    %844 = vmatpush1.msra.mxu0 0.0
    %845 = vmatprep.subr.mxu0 0.0
    %846 = vmatpush1.msra.mxu0 0.0
    %847 = vmatprep.subr.mxu0 0.0
    %848 = vmatpush1.msra.mxu0 0.0
    %849 = vmatprep.subr.mxu0 0.0
    %850 = vmatpush1.msra.mxu0 0.0
    %851 = vmatprep.subr.mxu0 0.0
    %852 = vmatpush1.msra.mxu0 0.0
    %853 = vmatprep.subr.mxu0 0.0
    %854 = vmatpush1.msra.mxu0 %v502
    %855 = vmatprep.subr.mxu0 0.0
    %856 = vmatpush1.msra.mxu0 %v501
    %857 = vmatprep.subr.mxu0 0.0
    %858 = vmatpush1.msra.mxu0 %v500
    %859 = vmatprep.subr.mxu0 0.0
    %860 = vmatpush1.msra.mxu0 %v499
    %861 = vmatprep.subr.mxu0 0.0
    %862 = vmatpush2.msra.mxu0 0.0
    %863 = vmatprep.subr.mxu0 0.0
    %864 = vmatpush2.msra.mxu0 0.0
    %865 = vmatprep.subr.mxu0 0.0
    %866 = vmatpush2.msra.mxu0 0.0
    %867 = vmatprep.subr.mxu0 0.0
    %868 = vmatpush2.msra.mxu0 0.0
    %869 = vmatprep.subr.mxu0 0.0
    %870 = vmatpush2.msra.mxu0 0.0
    %871 = vmatprep.subr.mxu0 0.0
    %872 = vmatpush2.msra.mxu0 0.0
    %873 = vmatprep.subr.mxu0 0.0
    %874 = vmatpush2.msra.mxu0 0.0
    %875 = vmatprep.subr.mxu0 0.0
    %876 = vmatpush2.msra.mxu0 0.0
    %877 = vmatprep.subr.mxu0 0.0
    %878 = vmatpush2.msra.mxu0 0.0
    %879 = vmatprep.subr.mxu0 0.0
    %880 = vmatpush2.msra.mxu0 0.0
    %881 = vmatprep.subr.mxu0 0.0
    %882 = vmatpush2.msra.mxu0 0.0
    %883 = vmatprep.subr.mxu0 0.0
    %884 = vmatpush2.msra.mxu0 0.0
    %885 = vmatprep.subr.mxu0 0.0
    %886 = vmatpush2.msra.mxu0 0.0
    %887 = vmatprep.subr.mxu0 0.0
    %888 = vmatpush2.msra.mxu0 0.0
    %889 = vmatprep.subr.mxu0 0.0
    %890 = vmatpush2.msra.mxu0 0.0
    %891 = vmatprep.subr.mxu0 0.0
    %892 = vmatpush2.msra.mxu0 0.0
    %893 = vmatprep.mubr.f32.mxu0 0.0
    %894 = vmatmul.mubr.f32.gmra.mxu0 %v827
    %v895 = vpop.f32.mrf.mxu0
    %v896 = vadd.f32 %v508, %v895
    %v897 = vpop.f32.mrf.mxu0
    %898 = vdwg.mxu0
    %900 = vset.pattern.permute.xlu0 0
    %901 = vperm.xlu0 %900, %v411
    %v902 = vpop.permute.xlu0 %901
    %v904 = vmul.f32 %v902, %v896
    %906 = vrot.lane.b32.xlu0 %v904, 96
    %v907 = vpop.permute.xlu0 %906
    %v909 = vadd.f32 %v410, %v907
    %911 = vrot.lane.b32.xlu0 %v909, 32
    %v912 = vpop.permute.xlu0 %911
    %v913 = vsel %vm208, %v912, 0
    %915 = vmatprep.subr.mxu0 0.0
    %916 = vmatpush1.msra.mxu0 0.0
    %917 = vmatprep.subr.mxu0 0.0
    %918 = vmatpush1.msra.mxu0 0.0
    %919 = vmatprep.subr.mxu0 0.0
    %920 = vmatpush1.msra.mxu0 0.0
    %921 = vmatprep.subr.mxu0 0.0
    %922 = vmatpush1.msra.mxu0 0.0
    %923 = vmatprep.subr.mxu0 0.0
    %924 = vmatpush1.msra.mxu0 0.0
    %925 = vmatprep.subr.mxu0 0.0
    %926 = vmatpush1.msra.mxu0 0.0
    %927 = vmatprep.subr.mxu0 0.0
    %928 = vmatpush1.msra.mxu0 0.0
    %929 = vmatprep.subr.mxu0 0.0
    %930 = vmatpush1.msra.mxu0 0.0
    %931 = vmatprep.subr.mxu0 0.0
    %932 = vmatpush1.msra.mxu0 0.0
    %933 = vmatprep.subr.mxu0 0.0
    %934 = vmatpush1.msra.mxu0 0.0
    %935 = vmatprep.subr.mxu0 0.0
    %936 = vmatpush1.msra.mxu0 0.0
    %937 = vmatprep.subr.mxu0 0.0
    %938 = vmatpush1.msra.mxu0 0.0
    %939 = vmatprep.subr.mxu0 0.0
    %940 = vmatpush1.msra.mxu0 %v415
    %941 = vmatprep.subr.mxu0 0.0
    %942 = vmatpush1.msra.mxu0 %v414
    %943 = vmatprep.subr.mxu0 0.0
    %944 = vmatpush1.msra.mxu0 %v413
    %945 = vmatprep.subr.mxu0 0.0
    %946 = vmatpush1.msra.mxu0 %v412
    %947 = vmatprep.subr.mxu0 0.0
    %948 = vmatpush2.msra.mxu0 0.0
    %949 = vmatprep.subr.mxu0 0.0
    %950 = vmatpush2.msra.mxu0 0.0
    %951 = vmatprep.subr.mxu0 0.0
    %952 = vmatpush2.msra.mxu0 0.0
    %953 = vmatprep.subr.mxu0 0.0
    %954 = vmatpush2.msra.mxu0 0.0
    %955 = vmatprep.subr.mxu0 0.0
    %956 = vmatpush2.msra.mxu0 0.0
    %957 = vmatprep.subr.mxu0 0.0
    %958 = vmatpush2.msra.mxu0 0.0
    %959 = vmatprep.subr.mxu0 0.0
    %960 = vmatpush2.msra.mxu0 0.0
    %961 = vmatprep.subr.mxu0 0.0
    %962 = vmatpush2.msra.mxu0 0.0
    %963 = vmatprep.subr.mxu0 0.0
    %964 = vmatpush2.msra.mxu0 0.0
    %965 = vmatprep.subr.mxu0 0.0
    %966 = vmatpush2.msra.mxu0 0.0
    %967 = vmatprep.subr.mxu0 0.0
    %968 = vmatpush2.msra.mxu0 0.0
    %969 = vmatprep.subr.mxu0 0.0
    %970 = vmatpush2.msra.mxu0 0.0
    %971 = vmatprep.subr.mxu0 0.0
    %972 = vmatpush2.msra.mxu0 0.0
    %973 = vmatprep.subr.mxu0 0.0
    %974 = vmatpush2.msra.mxu0 0.0
    %975 = vmatprep.subr.mxu0 0.0
    %976 = vmatpush2.msra.mxu0 0.0
    %977 = vmatprep.subr.mxu0 0.0
    %978 = vmatpush2.msra.mxu0 0.0
    %979 = vmatprep.mubr.f32.mxu0 0.0
    %980 = vmatmul.mubr.f32.gmra.mxu0 %v913
    %v981 = vpop.f32.mrf.mxu0
    %v982 = vadd.f32 %v421, %v981
    %v983 = vpop.f32.mrf.mxu0
    %984 = vdwg.mxu0
    %v985 = vtanh.pop %v982
    %v987 = vsel %vm208, %v985, 0
    %989 = vmatprep.subr.mxu0 0.0
    %990 = vmatpush1.msra.mxu0 0.0
    %991 = vmatprep.subr.mxu0 0.0
    %992 = vmatpush1.msra.mxu0 0.0
    %993 = vmatprep.subr.mxu0 0.0
    %994 = vmatpush1.msra.mxu0 0.0
    %995 = vmatprep.subr.mxu0 0.0
    %996 = vmatpush1.msra.mxu0 0.0
    %997 = vmatprep.subr.mxu0 0.0
    %998 = vmatpush1.msra.mxu0 0.0
    %999 = vmatprep.subr.mxu0 0.0
    %1000 = vmatpush1.msra.mxu0 0.0
    %1001 = vmatprep.subr.mxu0 0.0
    %1002 = vmatpush1.msra.mxu0 0.0
    %1003 = vmatprep.subr.mxu0 0.0
    %1004 = vmatpush1.msra.mxu0 0.0
    %1005 = vmatprep.subr.mxu0 0.0
    %1006 = vmatpush1.msra.mxu0 0.0
    %1007 = vmatprep.subr.mxu0 0.0
    %1008 = vmatpush1.msra.mxu0 0.0
    %1009 = vmatprep.subr.mxu0 0.0
    %1010 = vmatpush1.msra.mxu0 0.0
    %1011 = vmatprep.subr.mxu0 0.0
    %1012 = vmatpush1.msra.mxu0 0.0
    %1013 = vmatprep.subr.mxu0 0.0
    %1014 = vmatpush1.msra.mxu0 %v502
    %1015 = vmatprep.subr.mxu0 0.0
    %1016 = vmatpush1.msra.mxu0 %v501
    %1017 = vmatprep.subr.mxu0 0.0
    %1018 = vmatpush1.msra.mxu0 %v500
    %1019 = vmatprep.subr.mxu0 0.0
    %1020 = vmatpush1.msra.mxu0 %v499
    %1021 = vmatprep.subr.mxu0 0.0
    %1022 = vmatpush2.msra.mxu0 0.0
    %1023 = vmatprep.subr.mxu0 0.0
    %1024 = vmatpush2.msra.mxu0 0.0
    %1025 = vmatprep.subr.mxu0 0.0
    %1026 = vmatpush2.msra.mxu0 0.0
    %1027 = vmatprep.subr.mxu0 0.0
    %1028 = vmatpush2.msra.mxu0 0.0
    %1029 = vmatprep.subr.mxu0 0.0
    %1030 = vmatpush2.msra.mxu0 0.0
    %1031 = vmatprep.subr.mxu0 0.0
    %1032 = vmatpush2.msra.mxu0 0.0
    %1033 = vmatprep.subr.mxu0 0.0
    %1034 = vmatpush2.msra.mxu0 0.0
    %1035 = vmatprep.subr.mxu0 0.0
    %1036 = vmatpush2.msra.mxu0 0.0
    %1037 = vmatprep.subr.mxu0 0.0
    %1038 = vmatpush2.msra.mxu0 0.0
    %1039 = vmatprep.subr.mxu0 0.0
    %1040 = vmatpush2.msra.mxu0 0.0
    %1041 = vmatprep.subr.mxu0 0.0
    %1042 = vmatpush2.msra.mxu0 0.0
    %1043 = vmatprep.subr.mxu0 0.0
    %1044 = vmatpush2.msra.mxu0 0.0
    %1045 = vmatprep.subr.mxu0 0.0
    %1046 = vmatpush2.msra.mxu0 0.0
    %1047 = vmatprep.subr.mxu0 0.0
    %1048 = vmatpush2.msra.mxu0 0.0
    %1049 = vmatprep.subr.mxu0 0.0
    %1050 = vmatpush2.msra.mxu0 0.0
    %1051 = vmatprep.subr.mxu0 0.0
    %1052 = vmatpush2.msra.mxu0 0.0
    %1053 = vmatprep.mubr.f32.mxu0 0.0
    %1054 = vmatmul.mubr.f32.gmra.mxu0 %v987
    %v1055 = vpop.f32.mrf.mxu0
    %v1056 = vadd.f32 %v508, %v1055
    %v1057 = vpop.f32.mrf.mxu0
    %1058 = vdwg.mxu0
    %v1059 = vrcp.pop 6.0
    %v1060 = vmul.f32 %v411, %v1059
    %v1061 = vmul.f32 %v741, 2.0
    %v1062 = vadd.f32 %v580, %v1061
    %v1063 = vmul.f32 %v896, 2.0
    %v1064 = vadd.f32 %v1062, %v1063
    %v1065 = vadd.f32 %v1064, %v1056
    %1067 = vset.pattern.permute.xlu0 0
    %1068 = vperm.xlu0 %1067, %v1060
    %v1069 = vpop.permute.xlu0 %1068
    %v1071 = vmul.f32 %v1069, %v1065
    %1073 = vrot.lane.b32.xlu0 %v1071, 96
    %v1074 = vpop.permute.xlu0 %1073
    %v1076 = vadd.f32 %v410, %v1074
    %1078 = vrot.lane.b32.xlu0 %v1076, 32
    %v1079 = vpop.permute.xlu0 %1078
    %1081 = vst.msk [vmem:[#allocation13] sm:$0xff] %vm208, %v1079
    %1083 = vrot.lane.b32.xlu0 %v404, 96
    %v1084 = vpop.permute.xlu0 %1083
    %1086 = vst.msk [vmem:[#allocation14] sm:$0xff] %vm208, %v1084
    // Predicated region
    $region70: #{tpu_custom_call.1} parent=1 // pred_check
      _
    $region71: #{tpu_custom_call.1} parent=1 // pred_check_branch
      %1088 = sbr.rel (0) target = $region73
    $region72: #{tpu_custom_call.1} parent=1 // pred_region
      %s1090 = ssub.s32 128, 128
      %1091 = vsyncadd [#allocation4], %s1090
      %s1093 = sshll.u32 [#allocation13], 4
      %s1094 = int_to_ptr.vmem [resolvable:$true] %s1093
      %1096 = dma.vmem_to_hbm [thread:$0]  %s1094, 128, %s11, [#allocation4]
    $region73: #{tpu_custom_call.1} parent=1 // pred_fallthru
      _
    // Predicated region
    $region74: #{tpu_custom_call.1} parent=1 // pred_check
      _
    $region75: #{tpu_custom_call.1} parent=1 // pred_check_branch
      %1098 = sbr.rel (0) target = $region77
    $region76: #{tpu_custom_call.1} parent=1 // pred_region
      %s1100 = ssub.s32 128, 128
      %1101 = vsyncadd [#allocation15], %s1100
      %s1103 = sshll.u32 [#allocation14], 4
      %s1104 = int_to_ptr.vmem [resolvable:$true] %s1103
      %1106 = dma.vmem_to_hbm [thread:$0]  %s1104, 128, %s12, [#allocation15]
    $region77: #{tpu_custom_call.1} parent=1 // pred_fallthru
      _
    // Predicated region
    $region78: #{tpu_custom_call.1} parent=1 // pred_check
      _
    $region79: #{tpu_custom_call.1} parent=1 // pred_check_branch
      %1108 = sbr.rel (0) target = $region81
    $region80: #{tpu_custom_call.1} parent=1 // pred_region
      %1109 = dma.done [#allocation4], 128
    $region81: #{tpu_custom_call.1} parent=1 // pred_fallthru
      _
    // Predicated region
    $region82: #{tpu_custom_call.1} parent=1 // pred_check
      _
    $region83: #{tpu_custom_call.1} parent=1 // pred_check_branch
      %1111 = sbr.rel (0) target = $region85
    $region84: #{tpu_custom_call.1} parent=1 // pred_region
      %1112 = dma.done [#allocation15], 128
    $region85: #{tpu_custom_call.1} parent=1 // pred_fallthru
      _
    %1113 = vsyncpa [#allocation3], 1
    %1114 = vsyncpa [#allocation6], 1
    %1115 = vsyncpa [#allocation9], 1
    %1116 = vsyncpa [#allocation12], 1
    %1117 = vsyncpa [#allocation4], 1
    %1118 = vsyncpa [#allocation15], 1

</llo_original>
